<compile_context>
chip_gen: v6e
topology: v6e:2x2x1
jax: 0.10.0
libtpu: 0.0.40
codegen_flags: <defaults>
</compile_context>

<pallas_src>
from functools import partial

import jax
import jax.numpy as jnp
from jax.experimental import pallas as pl
from jax.experimental.pallas import tpu as pltpu


# ---------------------------------------------------------------------------
# Kernel
# ---------------------------------------------------------------------------
def _iaff_kernel(x_ref, r_ref, w1_ref, w2_ref, b1_ref, b2_ref, o_ref):
    nb, hw, c = x_ref.shape          # one batch-block of nb images, flattened HW
    two_i = w2_ref.shape[1]
    inter = two_i // 2
    m = nb * hw

    # Hoisted weight/bias loads (constant across the grid -> DMA'd once).
    w1_s1 = w1_ref[0]                # (C, 2i)   [w1_local  | w1_global]
    w1_s2 = w1_ref[1]                # (C, 2i)   [w1_local2 | w1_global]
    w2_s1 = w2_ref[0]                # (2i, C)   [w2_local ; w2_global]  (stacked on K)
    w2_s2 = w2_ref[1]                # (2i, C)   [w2_local2; w2_global]
    b1_s1 = b1_ref[0]                # (1, 2i) f32
    b1_s2 = b1_ref[1]
    b2_s1 = b2_ref[0]                # (1, C)  f32  (= b2_local + b2_global, pre-summed)
    b2_s2 = b2_ref[1]
    mm_dtype = w1_s1.dtype

    # Load inputs once, work in f32 for the elementwise path (v5e-safe).
    xf = x_ref[...].reshape(m, c).astype(jnp.float32)
    rf = r_ref[...].reshape(m, c).astype(jnp.float32)
    diff = xf - rf                   # hoisted, reused by both stages

    def fused_stage(inp_f32, w1, b1, w2, b2):
        # Layer 1: ONE wide matmul covers the local 1x1 conv and the (pre-pool)
        # global 1x1 conv.  (M, C) @ (C, 2i), f32 accumulation.
        h = jnp.dot(inp_f32.astype(mm_dtype), w1,
                    preferred_element_type=jnp.float32) + b1               # (M, 2i)
        h_loc = jnp.maximum(h[:, :inter], 0.0)                              # (M, i)
        # Global branch: AdaptiveAvgPool2d(1) commutes with the 1x1 conv + bias,
        # so pool AFTER the fused matmul (per batch element), then ReLU.
        h_glb = jnp.maximum(
            jnp.mean(h[:, inter:].reshape(nb, hw, inter), axis=1), 0.0)     # (nb, i)
        h_glb_b = jnp.broadcast_to(
            h_glb[:, None, :], (nb, hw, inter)).reshape(m, inter)           # (M, i)
        # Layer 2: fuse the local and (broadcast) global branches along K and hit
        # the MXU once: (M, 2i) @ (2i, C); bias already holds b2_loc + b2_glb.
        hk = jnp.concatenate([h_loc, h_glb_b], axis=1).astype(mm_dtype)     # (M, 2i)
        att = jnp.dot(hk, w2, preferred_element_type=jnp.float32) + b2      # (M, C)
        return jax.nn.sigmoid(att)                                          # f32

    # Stage 1: local_att + global_att on (x + residual)
    wei = fused_stage(xf + rf, w1_s1, b1_s1, w2_s1, b2_s1)
    xi = rf + wei * diff             # == x*wei + r*(1-wei)

    # Stage 2: local_att2 + (intentionally reused) global_att on xi
    wei2 = fused_stage(xi, w1_s2, b1_s2, w2_s2, b2_s2)
    out = rf + wei2 * diff           # == x*wei2 + r*(1-wei2)

    o_ref[...] = out.reshape(nb, hw, c).astype(o_ref.dtype)   # bf16 store


# ---------------------------------------------------------------------------
# Parameter prep (BN folding + operand packing) — glue, runs once
# ---------------------------------------------------------------------------
def _fold_bn(conv_w, conv_b, gamma, beta, mean, var, eps=1e-5):
    """Fold inference-mode BatchNorm into a preceding 1x1 conv.

    conv_w: (out, in), conv_b: (out,). Returns (in, out) matmul weight + (1, out) bias.
    """
    scale = gamma / jnp.sqrt(var + eps)
    w_eff = conv_w * scale[:, None]
    b_eff = (conv_b - mean) * scale + beta
    return w_eff.T.astype(jnp.float32), b_eff[None, :].astype(jnp.float32)


def _init_branch(key, channels, inter):
    """Deterministic params for conv(C->i)+BN, conv(i->C)+BN; BN folded."""
    ks = jax.random.split(key, 12)
    u = jax.random.uniform
    w1 = u(ks[0], (inter, channels), minval=-0.2, maxval=0.2)
    b1 = u(ks[1], (inter,), minval=-0.1, maxval=0.1)
    g1 = u(ks[2], (inter,), minval=0.5, maxval=1.5)
    be1 = u(ks[3], (inter,), minval=-0.1, maxval=0.1)
    m1 = u(ks[4], (inter,), minval=-0.1, maxval=0.1)
    v1 = u(ks[5], (inter,), minval=0.5, maxval=1.5)
    w2 = u(ks[6], (channels, inter), minval=-0.2, maxval=0.2)
    b2 = u(ks[7], (channels,), minval=-0.1, maxval=0.1)
    g2 = u(ks[8], (channels,), minval=0.5, maxval=1.5)
    be2 = u(ks[9], (channels,), minval=-0.1, maxval=0.1)
    m2 = u(ks[10], (channels,), minval=-0.1, maxval=0.1)
    v2 = u(ks[11], (channels,), minval=0.5, maxval=1.5)
    w1e, b1e = _fold_bn(w1, b1, g1, be1, m1, v1)
    w2e, b2e = _fold_bn(w2, b2, g2, be2, m2, v2)
    return w1e, b1e, w2e, b2e


def pack_params(params, mm_dtype=jnp.bfloat16):
    """Pack the 3 branches' folded params into 4 slabs (fewer DMA'd operands).

    W1: (2, C, 2i)  [local | global] on the output axis (one fused layer-1 matmul).
    W2: (2, 2i, C)  [local ; global] stacked on K (one fused layer-2 matmul).
    B1: (2, 1, 2i)  f32.
    B2: (2, 1, C)   f32, local+global biases PRE-SUMMED (saves a VPU add per element).
    """
    (w1l, b1l, w2l, b2l), (w1g, b1g, w2g, b2g), (w1l2, b1l2, w2l2, b2l2) = params
    w1 = jnp.stack([jnp.concatenate([w1l, w1g], axis=1),
                    jnp.concatenate([w1l2, w1g], axis=1)], axis=0).astype(mm_dtype)
    b1 = jnp.stack([jnp.concatenate([b1l, b1g], axis=1),
                    jnp.concatenate([b1l2, b1g], axis=1)], axis=0).astype(jnp.float32)
    w2 = jnp.stack([jnp.concatenate([w2l, w2g], axis=0),
                    jnp.concatenate([w2l2, w2g], axis=0)], axis=0).astype(mm_dtype)
    b2 = jnp.stack([b2l + b2g, b2l2 + b2g], axis=0).astype(jnp.float32)
    return w1, w2, b1, b2


# ---------------------------------------------------------------------------
# Forward wrappers
# ---------------------------------------------------------------------------
@partial(jax.jit, static_argnames=("batch_block",))
def iaff_forward_nhwc(x_nhwc, res_nhwc, packed, *, batch_block=1):
    """Production entry point: (N, H, W, C) inputs, no layout transposes.

    batch_block: batch elements folded into the MXU M dimension per grid step.
    The grid iterates (and on v7x parallelizes) over N // batch_block steps.
    """
    N, H, W, C = x_nhwc.shape
    HW = H * W
    w1, w2, b1, b2 = packed
    two_i = w2.shape[1]
    inter = two_i // 2
    mm_dtype = w1.dtype
    nb = batch_block
    assert N % nb == 0, "batch_block must divide N"
    num_steps = N // nb

    x = x_nhwc.reshape(N, HW, C).astype(mm_dtype)
    r = res_nhwc.reshape(N, HW, C).astype(mm_dtype)

    itemsize = jnp.dtype(mm_dtype).itemsize
    weight_bytes = sum(int(a.size) * a.dtype.itemsize for a in (w1, w2, b1, b2))
    blk_elems = nb * HW * C
    # 2x double-buffered bf16 x/r/out blocks + weight slabs + ~8 f32 live temporaries.
    est = 3 * 2 * blk_elems * itemsize + weight_bytes + 8 * blk_elems * 4
    vmem_limit = int(min(max(2 * est, 16 * 1024 * 1024), 64 * 1024 * 1024))

    M = N * HW
    flops = 2 * (2 * M * C * two_i + 2 * M * two_i * C)      # two stages, two matmuls each
    transcendentals = 2 * 2 * M * C                          # 2 sigmoids ~ exp + recip each
    bytes_accessed = int(3 * M * C * itemsize + weight_bytes)
    cost = pl.CostEstimate(flops=int(flops), transcendentals=int(transcendentals),
                           bytes_accessed=bytes_accessed)

    data_spec = pl.BlockSpec((nb, HW, C), lambda i: (i, 0, 0))
    const3 = lambda i: (0, 0, 0)

    out = pl.pallas_call(
        _iaff_kernel,
        out_shape=jax.ShapeDtypeStruct((N, HW, C), mm_dtype),   # bf16 output
        grid_spec=pltpu.PrefetchScalarGridSpec(
            num_scalar_prefetch=0,
            grid=(num_steps,),
            in_specs=[
                data_spec,                                   # x
                pl.BlockSpec((nb, HW, C), lambda i: (i, 0, 0)),  # residual
                pl.BlockSpec(tuple(w1.shape), const3),
                pl.BlockSpec(tuple(w2.shape), const3),
                pl.BlockSpec(tuple(b1.shape), const3),
                pl.BlockSpec(tuple(b2.shape), const3),
            ],
            out_specs=pl.BlockSpec((nb, HW, C), lambda i: (i, 0, 0)),
        ),
        compiler_params=pltpu.CompilerParams(
            dimension_semantics=("parallel",),               # both v7x TCs get work
            vmem_limit_bytes=vmem_limit),
        cost_estimate=cost,
    )(x, r, w1, w2, b1, b2)

    return out.reshape(N, H, W, C)


@jax.jit
def iaff_forward(x_nchw, res_nchw, packed):
    """NCHW adapter (PyTorch parity). The transposes are boundary glue only;
    production code should stay NHWC and call iaff_forward_nhwc directly."""
    x = jnp.transpose(x_nchw, (0, 2, 3, 1))
    r = jnp.transpose(res_nchw, (0, 2, 3, 1))
    out = iaff_forward_nhwc(x, r, packed)
    return jnp.transpose(out, (0, 3, 1, 2))


# ---------------------------------------------------------------------------
# Pure-JAX f32 reference (for validation)
# ---------------------------------------------------------------------------
def iaff_reference(x_nchw, res_nchw, params):
    N, C, H, W = x_nchw.shape
    x = jnp.transpose(x_nchw, (0, 2, 3, 1)).reshape(N, H * W, C)
    res = jnp.transpose(res_nchw, (0, 2, 3, 1)).reshape(N, H * W, C)
    (w1l, b1l, w2l, b2l), (w1g, b1g, w2g, b2g), (w1l2, b1l2, w2l2, b2l2) = params

    def local(inp, w1, b1, w2, b2):
        return jnp.maximum(inp @ w1 + b1, 0.0) @ w2 + b2

    def glob(inp, w1, b1, w2, b2):
        m = jnp.mean(inp, axis=1, keepdims=True)
        return jnp.maximum(m @ w1 + b1, 0.0) @ w2 + b2

    xa = x + res
    wei = jax.nn.sigmoid(local(xa, w1l, b1l, w2l, b2l) + glob(xa, w1g, b1g, w2g, b2g))
    xi = x * wei + res * (1.0 - wei)
    wei2 = jax.nn.sigmoid(local(xi, w1l2, b1l2, w2l2, b2l2) + glob(xi, w1g, b1g, w2g, b2g))
    xo = x * wei2 + res * (1.0 - wei2)
    return jnp.transpose(xo.reshape(N, H, W, C), (0, 3, 1, 2))


if __name__ == "__main__":
    channels, ratio = 64, 4
    N, H, W = 2, 8, 8
    inter = channels // ratio

    key = jax.random.PRNGKey(0)
    k_x, k_res, k_l, k_g, k_l2, k_g2 = jax.random.split(key, 6)

    x = jax.random.normal(k_x, (N, channels, H, W), dtype=jnp.float32)
    residual = jax.random.normal(k_res, (N, channels, H, W), dtype=jnp.float32)

    params = (
        _init_branch(k_l, channels, inter),    # local_att
        _init_branch(k_g, channels, inter),    # global_att
        _init_branch(k_l2, channels, inter),   # local_att2
    )
    _ = _init_branch(k_g2, channels, inter)    # global_att2: initialized but unused by forward()

    packed = pack_params(params)               # bf16 matmul slabs, f32 bias slabs

    out = iaff_forward(x, residual, packed)
    out = jax.block_until_ready(out)

    ref = iaff_reference(x, residual, params)
    assert out.shape == (N, channels, H, W)
    # bf16 inputs/output + bf16 MXU operands (f32 accumulation) -> relaxed tolerance
    # vs. the pure-f32 reference.
    assert jnp.allclose(out.astype(jnp.float32), ref, atol=6e-2, rtol=6e-2), \
        "mismatch vs pure-JAX reference"

    print("KERNEL_OK")
</pallas_src>

<mosaic_0001>
module attributes {stable_mosaic.version = 11 : i64} {
  func.func @_iaff_kernel(%arg0: i32, %arg1: memref<1x64x64xbf16, #tpu.memory_space<vmem>>, %arg2: memref<1x64x64xbf16, #tpu.memory_space<vmem>>, %arg3: memref<2x64x32xbf16, #tpu.memory_space<vmem>>, %arg4: memref<2x32x64xbf16, #tpu.memory_space<vmem>>, %arg5: memref<2x1x32xf32, #tpu.memory_space<vmem>>, %arg6: memref<2x1x64xf32, #tpu.memory_space<vmem>>, %arg7: memref<1x64x64xbf16, #tpu.memory_space<vmem>>) attributes {dimension_semantics = [#tpu.dimension_semantics<parallel>], iteration_bounds = array<i64: 2>, scalar_prefetch = 0 : i64, scratch_operands = 0 : i64, tpu.core_type = #tpu.core_type<tc>, window_params = [{transform_indices = @transform_0, window_bounds = array<i64: 1, 64, 64>}, {transform_indices = @transform_1, window_bounds = array<i64: 1, 64, 64>}, {pipeline_mode = #tpu.pipeline_mode<synchronous>, transform_indices = @transform_2, window_bounds = array<i64: 2, 64, 32>}, {pipeline_mode = #tpu.pipeline_mode<synchronous>, transform_indices = @transform_3, window_bounds = array<i64: 2, 32, 64>}, {pipeline_mode = #tpu.pipeline_mode<synchronous>, transform_indices = @transform_4, window_bounds = array<i64: 2, 1, 32>}, {pipeline_mode = #tpu.pipeline_mode<synchronous>, transform_indices = @transform_5, window_bounds = array<i64: 2, 1, 64>}, {transform_indices = @transform_6, window_bounds = array<i64: 1, 64, 64>}]} {
    %c0 = arith.constant 0 : index
    %c0_0 = arith.constant 0 : index
    %c0_1 = arith.constant 0 : index
    %0 = vector.load %arg3[%c0, %c0_0, %c0_1] : memref<2x64x32xbf16, #tpu.memory_space<vmem>>, vector<1x64x32xbf16>
    %1 = vector.shape_cast %0 : vector<1x64x32xbf16> to vector<64x32xbf16>
    %c1 = arith.constant 1 : index
    %c0_2 = arith.constant 0 : index
    %c0_3 = arith.constant 0 : index
    %2 = vector.load %arg3[%c1, %c0_2, %c0_3] : memref<2x64x32xbf16, #tpu.memory_space<vmem>>, vector<1x64x32xbf16>
    %3 = vector.shape_cast %2 : vector<1x64x32xbf16> to vector<64x32xbf16>
    %c0_4 = arith.constant 0 : index
    %c0_5 = arith.constant 0 : index
    %c0_6 = arith.constant 0 : index
    %4 = vector.load %arg4[%c0_4, %c0_5, %c0_6] : memref<2x32x64xbf16, #tpu.memory_space<vmem>>, vector<1x32x64xbf16>
    %5 = vector.shape_cast %4 : vector<1x32x64xbf16> to vector<32x64xbf16>
    %c1_7 = arith.constant 1 : index
    %c0_8 = arith.constant 0 : index
    %c0_9 = arith.constant 0 : index
    %6 = vector.load %arg4[%c1_7, %c0_8, %c0_9] : memref<2x32x64xbf16, #tpu.memory_space<vmem>>, vector<1x32x64xbf16>
    %7 = vector.shape_cast %6 : vector<1x32x64xbf16> to vector<32x64xbf16>
    %c0_10 = arith.constant 0 : index
    %c0_11 = arith.constant 0 : index
    %c0_12 = arith.constant 0 : index
    %8 = vector.load %arg5[%c0_10, %c0_11, %c0_12] : memref<2x1x32xf32, #tpu.memory_space<vmem>>, vector<1x1x32xf32>
    %9 = vector.shape_cast %8 : vector<1x1x32xf32> to vector<1x32xf32>
    %c1_13 = arith.constant 1 : index
    %c0_14 = arith.constant 0 : index
    %c0_15 = arith.constant 0 : index
    %10 = vector.load %arg5[%c1_13, %c0_14, %c0_15] : memref<2x1x32xf32, #tpu.memory_space<vmem>>, vector<1x1x32xf32>
    %11 = vector.shape_cast %10 : vector<1x1x32xf32> to vector<1x32xf32>
    %c0_16 = arith.constant 0 : index
    %c0_17 = arith.constant 0 : index
    %c0_18 = arith.constant 0 : index
    %12 = vector.load %arg6[%c0_16, %c0_17, %c0_18] : memref<2x1x64xf32, #tpu.memory_space<vmem>>, vector<1x1x64xf32>
    %13 = vector.shape_cast %12 : vector<1x1x64xf32> to vector<1x64xf32>
    %c1_19 = arith.constant 1 : index
    %c0_20 = arith.constant 0 : index
    %c0_21 = arith.constant 0 : index
    %14 = vector.load %arg6[%c1_19, %c0_20, %c0_21] : memref<2x1x64xf32, #tpu.memory_space<vmem>>, vector<1x1x64xf32>
    %15 = vector.shape_cast %14 : vector<1x1x64xf32> to vector<1x64xf32>
    %c0_22 = arith.constant 0 : index
    %c0_23 = arith.constant 0 : index
    %c0_24 = arith.constant 0 : index
    %16 = vector.load %arg1[%c0_22, %c0_23, %c0_24] : memref<1x64x64xbf16, #tpu.memory_space<vmem>>, vector<1x64x64xbf16>
    %17 = vector.shape_cast %16 : vector<1x64x64xbf16> to vector<64x64xbf16>
    %18 = arith.extf %17 : vector<64x64xbf16> to vector<64x64xf32>
    %c0_25 = arith.constant 0 : index
    %c0_26 = arith.constant 0 : index
    %c0_27 = arith.constant 0 : index
    %19 = vector.load %arg2[%c0_25, %c0_26, %c0_27] : memref<1x64x64xbf16, #tpu.memory_space<vmem>>, vector<1x64x64xbf16>
    %20 = vector.shape_cast %19 : vector<1x64x64xbf16> to vector<64x64xbf16>
    %21 = arith.extf %20 : vector<64x64xbf16> to vector<64x64xf32>
    %22 = arith.subf %18, %21 : vector<64x64xf32>
    %23 = arith.addf %18, %21 : vector<64x64xf32>
    %24 = arith.truncf %23 : vector<64x64xf32> to vector<64x64xbf16>
    %cst = arith.constant dense<0.000000e+00> : vector<64x32xf32>
    %25 = tpu.matmul %24, %1, %cst {dimension_numbers = #tpu.dot_dimension_numbers<[1], [0], [0], [1], [0, 0, 1, 1], [], []>} : vector<64x64xbf16>, vector<64x32xbf16>, vector<64x32xf32> -> vector<64x32xf32>
    %26 = vector.broadcast %9 : vector<1x32xf32> to vector<64x32xf32>
    %27 = arith.addf %25, %26 : vector<64x32xf32>
    %28 = vector.extract_strided_slice %27 {offsets = [0, 0], sizes = [64, 16], strides = [1, 1]} : vector<64x32xf32> to vector<64x16xf32>
    %cst_28 = arith.constant 0.000000e+00 : f32
    %29 = vector.broadcast %cst_28 : f32 to vector<64x16xf32>
    %30 = arith.maximumf %28, %29 : vector<64x16xf32>
    %31 = vector.extract_strided_slice %27 {offsets = [0, 16], sizes = [64, 16], strides = [1, 1]} : vector<64x32xf32> to vector<64x16xf32>
    %32 = vector.shape_cast %31 : vector<64x16xf32> to vector<1x64x16xf32>
    %cst_29 = arith.constant dense<0.000000e+00> : vector<1x16xf32>
    %33 = vector.multi_reduction <add>, %32, %cst_29 [1] : vector<1x64x16xf32> to vector<1x16xf32>
    %cst_30 = arith.constant 6.400000e+01 : f32
    %34 = vector.broadcast %cst_30 : f32 to vector<1x16xf32>
    %35 = arith.divf %33, %34 : vector<1x16xf32>
    %cst_31 = arith.constant 0.000000e+00 : f32
    %36 = vector.broadcast %cst_31 : f32 to vector<1x16xf32>
    %37 = arith.maximumf %35, %36 : vector<1x16xf32>
    %38 = vector.shape_cast %37 : vector<1x16xf32> to vector<1x1x16xf32>
    %39 = vector.shape_cast %38 : vector<1x1x16xf32> to vector<1x1x16xf32>
    %40 = vector.broadcast %39 : vector<1x1x16xf32> to vector<1x64x16xf32>
    %41 = vector.shape_cast %40 : vector<1x64x16xf32> to vector<64x16xf32>
    %42 = tpu.concatenate %30, %41 in 1 : vector<64x16xf32>, vector<64x16xf32> -> vector<64x32xf32>
    %43 = arith.truncf %42 : vector<64x32xf32> to vector<64x32xbf16>
    %cst_32 = arith.constant dense<0.000000e+00> : vector<64x64xf32>
    %44 = tpu.matmul %43, %5, %cst_32 {dimension_numbers = #tpu.dot_dimension_numbers<[1], [0], [0], [1], [0, 0, 1, 1], [], []>} : vector<64x32xbf16>, vector<32x64xbf16>, vector<64x64xf32> -> vector<64x64xf32>
    %45 = vector.broadcast %13 : vector<1x64xf32> to vector<64x64xf32>
    %46 = arith.addf %44, %45 : vector<64x64xf32>
    %47 = arith.negf %46 : vector<64x64xf32>
    %48 = math.exp %47 : vector<64x64xf32>
    %cst_33 = arith.constant 1.000000e+00 : f32
    %49 = vector.broadcast %cst_33 : f32 to vector<64x64xf32>
    %50 = arith.addf %49, %48 : vector<64x64xf32>
    %51 = arith.divf %49, %50 : vector<64x64xf32>
    %52 = arith.mulf %51, %22 : vector<64x64xf32>
    %53 = arith.addf %21, %52 : vector<64x64xf32>
    %54 = arith.truncf %53 : vector<64x64xf32> to vector<64x64xbf16>
    %cst_34 = arith.constant dense<0.000000e+00> : vector<64x32xf32>
    %55 = tpu.matmul %54, %3, %cst_34 {dimension_numbers = #tpu.dot_dimension_numbers<[1], [0], [0], [1], [0, 0, 1, 1], [], []>} : vector<64x64xbf16>, vector<64x32xbf16>, vector<64x32xf32> -> vector<64x32xf32>
    %56 = vector.broadcast %11 : vector<1x32xf32> to vector<64x32xf32>
    %57 = arith.addf %55, %56 : vector<64x32xf32>
    %58 = vector.extract_strided_slice %57 {offsets = [0, 0], sizes = [64, 16], strides = [1, 1]} : vector<64x32xf32> to vector<64x16xf32>
    %cst_35 = arith.constant 0.000000e+00 : f32
    %59 = vector.broadcast %cst_35 : f32 to vector<64x16xf32>
    %60 = arith.maximumf %58, %59 : vector<64x16xf32>
    %61 = vector.extract_strided_slice %57 {offsets = [0, 16], sizes = [64, 16], strides = [1, 1]} : vector<64x32xf32> to vector<64x16xf32>
    %62 = vector.shape_cast %61 : vector<64x16xf32> to vector<1x64x16xf32>
    %cst_36 = arith.constant dense<0.000000e+00> : vector<1x16xf32>
    %63 = vector.multi_reduction <add>, %62, %cst_36 [1] : vector<1x64x16xf32> to vector<1x16xf32>
    %cst_37 = arith.constant 6.400000e+01 : f32
    %64 = vector.broadcast %cst_37 : f32 to vector<1x16xf32>
    %65 = arith.divf %63, %64 : vector<1x16xf32>
    %cst_38 = arith.constant 0.000000e+00 : f32
    %66 = vector.broadcast %cst_38 : f32 to vector<1x16xf32>
    %67 = arith.maximumf %65, %66 : vector<1x16xf32>
    %68 = vector.shape_cast %67 : vector<1x16xf32> to vector<1x1x16xf32>
    %69 = vector.shape_cast %68 : vector<1x1x16xf32> to vector<1x1x16xf32>
    %70 = vector.broadcast %69 : vector<1x1x16xf32> to vector<1x64x16xf32>
    %71 = vector.shape_cast %70 : vector<1x64x16xf32> to vector<64x16xf32>
    %72 = tpu.concatenate %60, %71 in 1 : vector<64x16xf32>, vector<64x16xf32> -> vector<64x32xf32>
    %73 = arith.truncf %72 : vector<64x32xf32> to vector<64x32xbf16>
    %cst_39 = arith.constant dense<0.000000e+00> : vector<64x64xf32>
    %74 = tpu.matmul %73, %7, %cst_39 {dimension_numbers = #tpu.dot_dimension_numbers<[1], [0], [0], [1], [0, 0, 1, 1], [], []>} : vector<64x32xbf16>, vector<32x64xbf16>, vector<64x64xf32> -> vector<64x64xf32>
    %75 = vector.broadcast %15 : vector<1x64xf32> to vector<64x64xf32>
    %76 = arith.addf %74, %75 : vector<64x64xf32>
    %77 = arith.negf %76 : vector<64x64xf32>
    %78 = math.exp %77 : vector<64x64xf32>
    %cst_40 = arith.constant 1.000000e+00 : f32
    %79 = vector.broadcast %cst_40 : f32 to vector<64x64xf32>
    %80 = arith.addf %79, %78 : vector<64x64xf32>
    %81 = arith.divf %79, %80 : vector<64x64xf32>
    %82 = arith.mulf %81, %22 : vector<64x64xf32>
    %83 = arith.addf %21, %82 : vector<64x64xf32>
    %84 = vector.shape_cast %83 : vector<64x64xf32> to vector<1x64x64xf32>
    %85 = arith.truncf %84 : vector<1x64x64xf32> to vector<1x64x64xbf16>
    %c0_41 = arith.constant 0 : index
    %c0_42 = arith.constant 0 : index
    %c0_43 = arith.constant 0 : index
    %86 = vector.load %arg7[%c0_41, %c0_42, %c0_43] : memref<1x64x64xbf16, #tpu.memory_space<vmem>>, vector<1x64x64xbf16>
    tpu.vector_store %arg7[%c0_41, %c0_42, %c0_43], %85 {strides = array<i32>} : memref<1x64x64xbf16, #tpu.memory_space<vmem>>, vector<1x64x64xbf16>,
    return
  }
  func.func @transform_0(%arg0: i32) -> (i32, i32, i32) {
    %c0_i32 = arith.constant 0 : i32
    %c0_i32_0 = arith.constant 0 : i32
    %c0_i32_1 = arith.constant 0 : i32
    return %arg0, %c0_i32, %c0_i32_0 : i32, i32, i32
  }
  func.func @transform_1(%arg0: i32) -> (i32, i32, i32) {
    %c0_i32 = arith.constant 0 : i32
    %c0_i32_0 = arith.constant 0 : i32
    %c0_i32_1 = arith.constant 0 : i32
    return %arg0, %c0_i32, %c0_i32_0 : i32, i32, i32
  }
  func.func @transform_2(%arg0: i32) -> (i32, i32, i32) {
    %c0_i32 = arith.constant 0 : i32
    %c0_i32_0 = arith.constant 0 : i32
    %c0_i32_1 = arith.constant 0 : i32
    %c0_i32_2 = arith.constant 0 : i32
    return %c0_i32, %c0_i32_0, %c0_i32_1 : i32, i32, i32
  }
  func.func @transform_3(%arg0: i32) -> (i32, i32, i32) {
    %c0_i32 = arith.constant 0 : i32
    %c0_i32_0 = arith.constant 0 : i32
    %c0_i32_1 = arith.constant 0 : i32
    %c0_i32_2 = arith.constant 0 : i32
    return %c0_i32, %c0_i32_0, %c0_i32_1 : i32, i32, i32
  }
  func.func @transform_4(%arg0: i32) -> (i32, i32, i32) {
    %c0_i32 = arith.constant 0 : i32
    %c0_i32_0 = arith.constant 0 : i32
    %c0_i32_1 = arith.constant 0 : i32
    %c0_i32_2 = arith.constant 0 : i32
    return %c0_i32, %c0_i32_0, %c0_i32_1 : i32, i32, i32
  }
  func.func @transform_5(%arg0: i32) -> (i32, i32, i32) {
    %c0_i32 = arith.constant 0 : i32
    %c0_i32_0 = arith.constant 0 : i32
    %c0_i32_1 = arith.constant 0 : i32
    %c0_i32_2 = arith.constant 0 : i32
    return %c0_i32, %c0_i32_0, %c0_i32_1 : i32, i32, i32
  }
  func.func @transform_6(%arg0: i32) -> (i32, i32, i32) {
    %c0_i32 = arith.constant 0 : i32
    %c0_i32_0 = arith.constant 0 : i32
    %c0_i32_1 = arith.constant 0 : i32
    return %arg0, %c0_i32, %c0_i32_0 : i32, i32, i32
  }
}

</mosaic_0001>

<llo_original>
// kernel: iaff_forward_nhwc.1
$region0: #{iaff_forward_nhwc.1}
  #allocation0 [shape = 'u32[]', space=smem, size = 0x4, offset = 0x4, fixed_abs, tag = 'smem constant byte address 0x4 - core index']
  #allocation1 [shape = 'u32[144,128]{1,0:T(1,128)}', space=vmem, size = 0x12000, scoped, tag = 'internal scratch']
  %s0 = inlined_call_operand.vmem [shape: bf16[2,64,64], index: 0, kind: input, shape index: {}]
  %s1 = inlined_call_operand.vmem [shape: bf16[2,64,64], index: 1, kind: input, shape index: {}]
  %s2 = inlined_call_operand.vmem [shape: bf16[2,64,32], index: 2, kind: input, shape index: {}]
  %s3 = inlined_call_operand.vmem [shape: bf16[2,32,64], index: 3, kind: input, shape index: {}]
  %s4 = inlined_call_operand.vmem [shape: f32[2,1,32], index: 4, kind: input, shape index: {}]
  %s5 = inlined_call_operand.vmem [shape: f32[2,1,64], index: 5, kind: input, shape index: {}]
  %s6 = inlined_call_operand.hbm [shape: bf16[2,64,64], index: 6, kind: output, shape index: {}]
  %s7 = sld [smem:[#allocation0]]
  $region57: #{iaff_forward_nhwc.1} parent=0
    _
  %s9 = ssub.s32 1, %s7
  %s10 = scalar_select 0, %s9, %s7
  $region1: #{iaff_forward_nhwc.1} parent=0
    #allocation2 [shape = 'u8[32768]{0}', space=vmem, size = 0x8000, scoped, tag = 'output window, operand 0']
    #allocation3 [shape = 's32[2]{0}', space=sflag, size = 0x8, scoped, tag = 'scoped memory for iaff_forward_nhwc.1']
    %11 = vsyncpa [#allocation3], 0
    %s12 = scalar_lea.sflag [#allocation3], 1
    %13 = vsyncpa %s12, 0
    loop: start=0, step=1, limit=4
    $region2: #{iaff_forward_nhwc.1} parent=1 // loop_pre_header
      _
    $region3: #{iaff_forward_nhwc.1} parent=1 // loop_header
      %s15 = sphi 0, %s19
      %p16 = scmp.ge.s32.totalorder %s15, 4
      %s25 = sphi 0, %s27
      %s28 = sphi 0, %s25
      %s29 = sphi 0, %s28
      %s45 = sphi 0, %s29
      %s51 = sphi 0, %s53
      %s54 = sphi 0, %s51
      %s55 = sphi 0, %s54
      %s71 = sphi 0, %s55
      %s75 = sphi 0, %s75
      %s77 = sphi 0, %s75
      %s78 = sphi 0, %s77
      %s92 = sphi 0, %s78
      %s96 = sphi 0, %s96
      %s98 = sphi 0, %s96
      %s99 = sphi 0, %s98
      %s113 = sphi 0, %s99
      %s117 = sphi 0, %s117
      %s119 = sphi 0, %s117
      %s120 = sphi 0, %s119
      %s134 = sphi 0, %s120
      %s138 = sphi 0, %s138
      %s140 = sphi 0, %s138
      %s141 = sphi 0, %s140
      %s155 = sphi 0, %s141
      %s161 = sphi 0, %s163
      %s164 = sphi 0, %s161
      %s165 = sphi 0, %s164
      %s181 = sphi 0, %s165
    $region4: #{iaff_forward_nhwc.1} parent=1 // loop_header_branch
      %18 = sbr.rel (%p16) target = $region8
    $region5: #{iaff_forward_nhwc.1} parent=1 // loop_body
      %s20 = ssub.s32 %s15, 1
      %s21 = ssub.s32 %s15, 2
      %s22 = sadd.s32 %s15, 1
      %s23 = ssub.s32 %s15, %s22
      %p24 = scmp.eq.s32.totalorder %s23, 0
      %s26 = sadd.s32 %s25, 1
      %s27 = scalar_select %p24, %s25, %s26
      %p30 = pneg %p24
      %p31 = scmp.eq.s32.totalorder %s15, 1
      %p32 = por %p30, %p31
      %p33 = scmp.ne.s32.totalorder %s25, %s28
      %p34 = scmp.eq.s32.totalorder %s15, 0
      %p35 = por %p33, %p34
      %p36 = scmp.ne.s32.totalorder %s25, %s28
      %p37 = scmp.eq.s32.totalorder %s20, 1
      %p38 = por %p36, %p37
      %p39 = scmp.ne.s32.totalorder %s28, %s29
      %p40 = scmp.eq.s32.totalorder %s20, 0
      %p41 = por %p39, %p40
      %p42 = scmp.ne.s32.totalorder %s28, %s29
      %p43 = scmp.eq.s32.totalorder %s21, 1
      %p44 = por %p42, %p43
      %p46 = scmp.ne.s32.totalorder %s29, %s45
      %p47 = scmp.eq.s32.totalorder %s21, 0
      %p48 = por %p46, %p47
      %s49 = ssub.s32 %s15, %s22
      %p50 = scmp.eq.s32.totalorder %s49, 0
      %s52 = sadd.s32 %s51, 1
      %s53 = scalar_select %p50, %s51, %s52
      %p56 = pneg %p50
      %p57 = scmp.eq.s32.totalorder %s15, 1
      %p58 = por %p56, %p57
      %p59 = scmp.ne.s32.totalorder %s51, %s54
      %p60 = scmp.eq.s32.totalorder %s15, 0
      %p61 = por %p59, %p60
      %p62 = scmp.ne.s32.totalorder %s51, %s54
      %p63 = scmp.eq.s32.totalorder %s20, 1
      %p64 = por %p62, %p63
      %p65 = scmp.ne.s32.totalorder %s54, %s55
      %p66 = scmp.eq.s32.totalorder %s20, 0
      %p67 = por %p65, %p66
      %p68 = scmp.ne.s32.totalorder %s54, %s55
      %p69 = scmp.eq.s32.totalorder %s21, 1
      %p70 = por %p68, %p69
      %p72 = scmp.ne.s32.totalorder %s55, %s71
      %p73 = scmp.eq.s32.totalorder %s21, 0
      %p74 = por %p72, %p73
      %s76 = sadd.s32 %s75, 1
      %p79 = scmp.eq.s32.totalorder %s15, 1
      %p80 = scmp.ne.s32.totalorder %s75, %s77
      %p81 = scmp.eq.s32.totalorder %s15, 0
      %p82 = por %p80, %p81
      %p83 = scmp.ne.s32.totalorder %s75, %s77
      %p84 = scmp.eq.s32.totalorder %s20, 1
      %p85 = por %p83, %p84
      %p86 = scmp.ne.s32.totalorder %s77, %s78
      %p87 = scmp.eq.s32.totalorder %s20, 0
      %p88 = por %p86, %p87
      %p89 = scmp.ne.s32.totalorder %s77, %s78
      %p90 = scmp.eq.s32.totalorder %s21, 1
      %p91 = por %p89, %p90
      %p93 = scmp.ne.s32.totalorder %s78, %s92
      %p94 = scmp.eq.s32.totalorder %s21, 0
      %p95 = por %p93, %p94
      %s97 = sadd.s32 %s96, 1
      %p100 = scmp.eq.s32.totalorder %s15, 1
      %p101 = scmp.ne.s32.totalorder %s96, %s98
      %p102 = scmp.eq.s32.totalorder %s15, 0
      %p103 = por %p101, %p102
      %p104 = scmp.ne.s32.totalorder %s96, %s98
      %p105 = scmp.eq.s32.totalorder %s20, 1
      %p106 = por %p104, %p105
      %p107 = scmp.ne.s32.totalorder %s98, %s99
      %p108 = scmp.eq.s32.totalorder %s20, 0
      %p109 = por %p107, %p108
      %p110 = scmp.ne.s32.totalorder %s98, %s99
      %p111 = scmp.eq.s32.totalorder %s21, 1
      %p112 = por %p110, %p111
      %p114 = scmp.ne.s32.totalorder %s99, %s113
      %p115 = scmp.eq.s32.totalorder %s21, 0
      %p116 = por %p114, %p115
      %s118 = sadd.s32 %s117, 1
      %p121 = scmp.eq.s32.totalorder %s15, 1
      %p122 = scmp.ne.s32.totalorder %s117, %s119
      %p123 = scmp.eq.s32.totalorder %s15, 0
      %p124 = por %p122, %p123
      %p125 = scmp.ne.s32.totalorder %s117, %s119
      %p126 = scmp.eq.s32.totalorder %s20, 1
      %p127 = por %p125, %p126
      %p128 = scmp.ne.s32.totalorder %s119, %s120
      %p129 = scmp.eq.s32.totalorder %s20, 0
      %p130 = por %p128, %p129
      %p131 = scmp.ne.s32.totalorder %s119, %s120
      %p132 = scmp.eq.s32.totalorder %s21, 1
      %p133 = por %p131, %p132
      %p135 = scmp.ne.s32.totalorder %s120, %s134
      %p136 = scmp.eq.s32.totalorder %s21, 0
      %p137 = por %p135, %p136
      %s139 = sadd.s32 %s138, 1
      %p142 = scmp.eq.s32.totalorder %s15, 1
      %p143 = scmp.ne.s32.totalorder %s138, %s140
      %p144 = scmp.eq.s32.totalorder %s15, 0
      %p145 = por %p143, %p144
      %p146 = scmp.ne.s32.totalorder %s138, %s140
      %p147 = scmp.eq.s32.totalorder %s20, 1
      %p148 = por %p146, %p147
      %p149 = scmp.ne.s32.totalorder %s140, %s141
      %p150 = scmp.eq.s32.totalorder %s20, 0
      %p151 = por %p149, %p150
      %p152 = scmp.ne.s32.totalorder %s140, %s141
      %p153 = scmp.eq.s32.totalorder %s21, 1
      %p154 = por %p152, %p153
      %p156 = scmp.ne.s32.totalorder %s141, %s155
      %p157 = scmp.eq.s32.totalorder %s21, 0
      %p158 = por %p156, %p157
      %s159 = ssub.s32 %s15, %s22
      %p160 = scmp.eq.s32.totalorder %s159, 0
      %s162 = sadd.s32 %s161, 1
      %s163 = scalar_select %p160, %s161, %s162
      %p166 = pneg %p160
      %p167 = scmp.eq.s32.totalorder %s15, 1
      %p168 = por %p166, %p167
      %p169 = scmp.ne.s32.totalorder %s161, %s164
      %p170 = scmp.eq.s32.totalorder %s15, 0
      %p171 = por %p169, %p170
      %p172 = scmp.ne.s32.totalorder %s161, %s164
      %p173 = scmp.eq.s32.totalorder %s20, 1
      %p174 = por %p172, %p173
      %p175 = scmp.ne.s32.totalorder %s164, %s165
      %p176 = scmp.eq.s32.totalorder %s20, 0
      %p177 = por %p175, %p176
      %p178 = scmp.ne.s32.totalorder %s164, %s165
      %p179 = scmp.eq.s32.totalorder %s21, 1
      %p180 = por %p178, %p179
      %p182 = scmp.ne.s32.totalorder %s165, %s181
      %p183 = scmp.eq.s32.totalorder %s21, 0
      %p184 = por %p182, %p183
      %p185 = scmp.le.s32.totalorder 1, %s15
      %p186 = scmp.lt.s32.totalorder %s15, 3
      %p187 = pnand %p185, %p186
      %p188 = pneg %p187
      // Predicated region
      $region9: #{iaff_forward_nhwc.1} parent=5 // pred_check
        _
      $region10: #{iaff_forward_nhwc.1} parent=5 // pred_check_branch
        %190 = sbr.rel (%p187) target = $region12
      $region11: #{iaff_forward_nhwc.1} parent=5 // pred_region
        %s191 = ssub.s32 %s15, 1
        // Predicated region
        $region13: #{iaff_forward_nhwc.1} parent=11 // pred_check
          %p192 = pneg %p88
        $region14: #{iaff_forward_nhwc.1} parent=11 // pred_check_branch
          %194 = sbr.rel (%p192) target = $region16
        $region15: #{iaff_forward_nhwc.1} parent=11 // pred_region
          _
        $region16: #{iaff_forward_nhwc.1} parent=11 // pred_fallthru
          _
        // Predicated region
        $region17: #{iaff_forward_nhwc.1} parent=11 // pred_check
          %p195 = pneg %p109
        $region18: #{iaff_forward_nhwc.1} parent=11 // pred_check_branch
          %197 = sbr.rel (%p195) target = $region20
        $region19: #{iaff_forward_nhwc.1} parent=11 // pred_region
          _
        $region20: #{iaff_forward_nhwc.1} parent=11 // pred_fallthru
          _
        // Predicated region
        $region21: #{iaff_forward_nhwc.1} parent=11 // pred_check
          %p198 = pneg %p130
        $region22: #{iaff_forward_nhwc.1} parent=11 // pred_check_branch
          %200 = sbr.rel (%p198) target = $region24
        $region23: #{iaff_forward_nhwc.1} parent=11 // pred_region
          _
        $region24: #{iaff_forward_nhwc.1} parent=11 // pred_fallthru
          _
        // Predicated region
        $region25: #{iaff_forward_nhwc.1} parent=11 // pred_check
          %p201 = pneg %p151
        $region26: #{iaff_forward_nhwc.1} parent=11 // pred_check_branch
          %203 = sbr.rel (%p201) target = $region28
        $region27: #{iaff_forward_nhwc.1} parent=11 // pred_region
          _
        $region28: #{iaff_forward_nhwc.1} parent=11 // pred_fallthru
          _
      $region12: #{iaff_forward_nhwc.1} parent=5 // pred_fallthru
        _
      %p204 = scmp.lt.s32.totalorder %s15, 2
      // Predicated region
      $region29: #{iaff_forward_nhwc.1} parent=5 // pred_check
        %p205 = pneg %p204
      $region30: #{iaff_forward_nhwc.1} parent=5 // pred_check_branch
        %207 = sbr.rel (%p205) target = $region32
      $region31: #{iaff_forward_nhwc.1} parent=5 // pred_region
        // Predicated region
        $region33: #{iaff_forward_nhwc.1} parent=31 // pred_check
          %p208 = pneg %p35
        $region34: #{iaff_forward_nhwc.1} parent=31 // pred_check_branch
          %210 = sbr.rel (%p208) target = $region36
        $region35: #{iaff_forward_nhwc.1} parent=31 // pred_region
          %p211 = scmp.lt.s32.totalorder %s15, 1
          %s212 = scalar_select %p211, %s15, 1
          %s213 = smul.addr %s212, 8
          %s214 = smul.addr %s213, 4
          %s215 = scalar_lea.vmem %s0, %s214
        $region36: #{iaff_forward_nhwc.1} parent=31 // pred_fallthru
          _
        // Predicated region
        $region37: #{iaff_forward_nhwc.1} parent=31 // pred_check
          %p216 = pneg %p61
        $region38: #{iaff_forward_nhwc.1} parent=31 // pred_check_branch
          %218 = sbr.rel (%p216) target = $region40
        $region39: #{iaff_forward_nhwc.1} parent=31 // pred_region
          %p219 = scmp.lt.s32.totalorder %s15, 1
          %s220 = scalar_select %p219, %s15, 1
          %s221 = smul.addr %s220, 8
          %s222 = smul.addr %s221, 4
          %s223 = scalar_lea.vmem %s1, %s222
        $region40: #{iaff_forward_nhwc.1} parent=31 // pred_fallthru
          _
      $region32: #{iaff_forward_nhwc.1} parent=5 // pred_fallthru
        _
      %p224 = scmp.le.s32.totalorder 1, %s15
      %p225 = scmp.lt.s32.totalorder %s15, 3
      %p226 = pnand %p224, %p225
      %p227 = pneg %p226
      // Predicated region
      $region41: #{iaff_forward_nhwc.1} parent=5 // pred_check
        _
      $region42: #{iaff_forward_nhwc.1} parent=5 // pred_check_branch
        %229 = sbr.rel (%p226) target = $region44
      $region43: #{iaff_forward_nhwc.1} parent=5 // pred_region
        %s230 = ssub.s32 %s15, 1
        %p231 = scmp.lt.s32.totalorder %s20, 1
        %s232 = scalar_select %p231, %s20, 1
        %s233 = smul.addr %s232, 8
        %s234 = smul.addr %s233, 4
        %s235 = scalar_lea.vmem %s0, %s234
        %p236 = pneg %p41
        %p237 = pneg %p38
        %p238 = scmp.lt.s32.totalorder %s20, 1
        %s239 = scalar_select %p238, %s20, 1
        %s240 = smul.addr %s239, 8
        %s241 = smul.addr %s240, 4
        %s242 = scalar_lea.vmem %s1, %s241
        %p243 = pneg %p67
        %p244 = pneg %p64
        %p245 = pneg %p88
        %p246 = pneg %p85
        %p247 = pneg %p109
        %p248 = pneg %p106
        %p249 = pneg %p130
        %p250 = pneg %p127
        %p251 = pneg %p151
        %p252 = pneg %p148
        %p253 = pneg %p177
        %p254 = pneg %p174
        %s255 = sand.u32 %s164, 1
        %s256 = scalar_lea.sflag [#allocation3], %s255
        %s257 = sand.u32 %s164, 1
        %s258 = smul.addr %s257, 32
        %s259 = scalar_lea.vmem [#allocation2], %s258
        %p260 = scmp.lt.s32.totalorder %s20, 1
        %s261 = scalar_select %p260, %s20, 1
        %s262 = smul.addr %s261, 8
        %s263 = smul.addr %s262, 4
        %s264 = scalar_lea.vmem %s0, %s263
        %p265 = scmp.lt.s32.totalorder %s20, 1
        %s266 = scalar_select %p265, %s20, 1
        %s267 = smul.addr %s266, 8
        %s268 = smul.addr %s267, 4
        %s269 = scalar_lea.vmem %s1, %s268
        %v271 = vld [vmem:[%s2] sm:$0xf]
        %v272 = vld [vmem:[%s2 + $0x4] sm:$0xf]
        %v273 = vld [vmem:[%s2 + $0x8] sm:$0xf]
        %v274 = vld [vmem:[%s2 + $0xc] sm:$0xf]
        %v275 = vld [vmem:[%s2 + $0x10] sm:$0xf]
        %v276 = vld [vmem:[%s2 + $0x14] sm:$0xf]
        %v277 = vld [vmem:[%s2 + $0x18] sm:$0xf]
        %v278 = vld [vmem:[%s2 + $0x1c] sm:$0xf]
        %s279 = scalar_lea.vmem %s2, 32
        %v280 = vld [vmem:[%s279] sm:$0xf]
        %v281 = vld [vmem:[%s279 + $0x4] sm:$0xf]
        %v282 = vld [vmem:[%s279 + $0x8] sm:$0xf]
        %v283 = vld [vmem:[%s279 + $0xc] sm:$0xf]
        %v284 = vld [vmem:[%s279 + $0x10] sm:$0xf]
        %v285 = vld [vmem:[%s279 + $0x14] sm:$0xf]
        %v286 = vld [vmem:[%s279 + $0x18] sm:$0xf]
        %v287 = vld [vmem:[%s279 + $0x1c] sm:$0xf]
        %v288 = vld [vmem:[%s3] sm:$0xf]
        %v289 = vld [vmem:[%s3 + $0x4] sm:$0xf]
        %v290 = vld [vmem:[%s3 + $0x8] sm:$0xf]
        %v291 = vld [vmem:[%s3 + $0xc] sm:$0xf]
        %s292 = scalar_lea.vmem %s3, 16
        %v293 = vld [vmem:[%s292] sm:$0xf]
        %v294 = vld [vmem:[%s292 + $0x4] sm:$0xf]
        %v295 = vld [vmem:[%s292 + $0x8] sm:$0xf]
        %v296 = vld [vmem:[%s292 + $0xc] sm:$0xf]
        %v297 = vld [vmem:[%s4] sm:$0x1]
        %s298 = scalar_lea.vmem %s4, 1
        %v299 = vld [vmem:[%s298] sm:$0x1]
        %v300 = vld [vmem:[%s5] sm:$0x1]
        %s301 = scalar_lea.vmem %s5, 1
        %v302 = vld [vmem:[%s301] sm:$0x1]
        %v303 = vld [vmem:[%s264] sm:$0xf]
        %v304 = vld [vmem:[%s264 + $0x4] sm:$0xf]
        %v305 = vld [vmem:[%s264 + $0x8] sm:$0xf]
        %v306 = vld [vmem:[%s264 + $0xc] sm:$0xf]
        %v307 = vld [vmem:[%s264 + $0x10] sm:$0xf]
        %v308 = vld [vmem:[%s264 + $0x14] sm:$0xf]
        %v309 = vld [vmem:[%s264 + $0x18] sm:$0xf]
        %v310 = vld [vmem:[%s264 + $0x1c] sm:$0xf]
        %v311 = vunpack.c.l.bf16 %v303
        %v312 = vunpack.c.l.bf16 %v304
        %v313 = vunpack.c.l.bf16 %v305
        %v314 = vunpack.c.l.bf16 %v306
        %v315 = vunpack.c.l.bf16 %v307
        %v316 = vunpack.c.l.bf16 %v308
        %v317 = vunpack.c.l.bf16 %v309
        %v318 = vunpack.c.l.bf16 %v310
        %v319 = vld [vmem:[%s269] sm:$0xf]
        %v320 = vld [vmem:[%s269 + $0x4] sm:$0xf]
        %v321 = vld [vmem:[%s269 + $0x8] sm:$0xf]
        %v322 = vld [vmem:[%s269 + $0xc] sm:$0xf]
        %v323 = vld [vmem:[%s269 + $0x10] sm:$0xf]
        %v324 = vld [vmem:[%s269 + $0x14] sm:$0xf]
        %v325 = vld [vmem:[%s269 + $0x18] sm:$0xf]
        %v326 = vld [vmem:[%s269 + $0x1c] sm:$0xf]
        %v327 = vunpack.c.l.bf16 %v319
        %v328 = vunpack.c.l.bf16 %v320
        %v329 = vunpack.c.l.bf16 %v321
        %v330 = vunpack.c.l.bf16 %v322
        %v331 = vunpack.c.l.bf16 %v323
        %v332 = vunpack.c.l.bf16 %v324
        %v333 = vunpack.c.l.bf16 %v325
        %v334 = vunpack.c.l.bf16 %v326
        %v335 = vsub.f32 %v311, %v327
        %v336 = vsub.f32 %v312, %v328
        %v337 = vsub.f32 %v313, %v329
        %v338 = vsub.f32 %v314, %v330
        %v339 = vsub.f32 %v315, %v331
        %v340 = vsub.f32 %v316, %v332
        %v341 = vsub.f32 %v317, %v333
        %v342 = vsub.f32 %v318, %v334
        %v343 = vadd.f32 %v311, %v327
        %v344 = vadd.f32 %v312, %v328
        %v345 = vadd.f32 %v313, %v329
        %v346 = vadd.f32 %v314, %v330
        %v347 = vadd.f32 %v315, %v331
        %v348 = vadd.f32 %v316, %v332
        %v349 = vadd.f32 %v317, %v333
        %v350 = vadd.f32 %v318, %v334
        %v351 = vpack.c.bf16 %v344, %v343
        %v352 = vpack.c.bf16 %v346, %v345
        %v353 = vpack.c.bf16 %v348, %v347
        %v354 = vpack.c.bf16 %v350, %v349
        %v356 = vlaneseq
        %v357 = vshrl.u32 %v356, 7
        %v358 = vsub.s32 0, %v357
        %v359 = vrot.slane %v297, %v358
        %v369 = vunpack.c.l.b16 %v271
        %v370 = vunpack.c.l.b16 %v272
        %v371 = vunpack.c.l.b16 %v273
        %v372 = vunpack.c.l.b16 %v274
        %v373 = vunpack.c.l.b16 %v275
        %v374 = vunpack.c.l.b16 %v276
        %v375 = vunpack.c.l.b16 %v277
        %v376 = vunpack.c.l.b16 %v278
        %v377 = vpack.c.b16 %v370, %v369
        %v378 = vpack.c.b16 %v372, %v371
        %v379 = vpack.c.b16 %v374, %v373
        %v380 = vpack.c.b16 %v376, %v375
        %vm385 = vcmask 523264
        %v387 = vsel %vm385, %v351, 0
        %v390 = vsel %vm385, %v352, 0
        %v393 = vsel %vm385, %v353, 0
        %v396 = vsel %vm385, %v354, 0
        %398 = vmatprep.subr.bf16.mxu0 0
        %399 = vmatpush1.bf16.msra.mxu0 0
        %400 = vmatprep.subr.bf16.mxu0 0
        %401 = vmatpush1.bf16.msra.mxu0 0
        %402 = vmatprep.subr.bf16.mxu0 0
        %403 = vmatpush1.bf16.msra.mxu0 0
        %404 = vmatprep.subr.bf16.mxu0 0
        %405 = vmatpush1.bf16.msra.mxu0 0
        %406 = vmatprep.subr.bf16.mxu0 0
        %407 = vmatpush1.bf16.msra.mxu0 %v380
        %408 = vmatprep.subr.bf16.mxu0 0
        %409 = vmatpush1.bf16.msra.mxu0 %v379
        %410 = vmatprep.subr.bf16.mxu0 0
        %411 = vmatpush1.bf16.msra.mxu0 %v378
        %412 = vmatprep.subr.bf16.mxu0 0
        %413 = vmatpush1.bf16.msra.mxu0 %v377
        %414 = vmatprep.subr.bf16.mxu0 0
        %415 = vmatpush2.bf16.msra.mxu0 0
        %416 = vmatprep.subr.bf16.mxu0 0
        %417 = vmatpush2.bf16.msra.mxu0 0
        %418 = vmatprep.subr.bf16.mxu0 0
        %419 = vmatpush2.bf16.msra.mxu0 0
        %420 = vmatprep.subr.bf16.mxu0 0
        %421 = vmatpush2.bf16.msra.mxu0 0
        %422 = vmatprep.subr.bf16.mxu0 0
        %423 = vmatpush2.bf16.msra.mxu0 0
        %424 = vmatprep.subr.bf16.mxu0 0
        %425 = vmatpush2.bf16.msra.mxu0 0
        %426 = vmatprep.subr.bf16.mxu0 0
        %427 = vmatpush2.bf16.msra.mxu0 0
        %428 = vmatprep.subr.bf16.mxu0 0
        %429 = vmatpush2.bf16.msra.mxu0 0
        %430 = vmatprep.mubr.bf16.mxu0 0
        %431 = vmatmul.mubr.bf16.gmra.mxu0 %v387
        %v432 = vpop.f32.mrf.mxu0
        %v433 = vadd.f32 %v359, %v432
        %v434 = vpop.f32.mrf.mxu0
        %v435 = vpop.f32.mrf.mxu0
        %v436 = vadd.f32 %v359, %v435
        %v437 = vpop.f32.mrf.mxu0
        %438 = vmatprep.mubr.bf16.mxu0 0
        %439 = vmatmul.mubr.bf16.gmra.mxu0 %v390
        %v440 = vpop.f32.mrf.mxu0
        %v441 = vadd.f32 %v359, %v440
        %v442 = vpop.f32.mrf.mxu0
        %v443 = vpop.f32.mrf.mxu0
        %v444 = vadd.f32 %v359, %v443
        %v445 = vpop.f32.mrf.mxu0
        %446 = vmatprep.mubr.bf16.mxu0 0
        %447 = vmatmul.mubr.bf16.gmra.mxu0 %v393
        %v448 = vpop.f32.mrf.mxu0
        %v449 = vadd.f32 %v359, %v448
        %v450 = vpop.f32.mrf.mxu0
        %v451 = vpop.f32.mrf.mxu0
        %v452 = vadd.f32 %v359, %v451
        %v453 = vpop.f32.mrf.mxu0
        %454 = vmatprep.mubr.bf16.mxu0 0
        %455 = vmatmul.mubr.bf16.gmra.mxu0 %v396
        %v456 = vpop.f32.mrf.mxu0
        %v457 = vadd.f32 %v359, %v456
        %v458 = vpop.f32.mrf.mxu0
        %v459 = vpop.f32.mrf.mxu0
        %v460 = vadd.f32 %v359, %v459
        %v461 = vpop.f32.mrf.mxu0
        %462 = vdwg.mxu0
        %v463 = vmax.f32 %v433, 0.0
        %v464 = vmax.f32 %v436, 0.0
        %v465 = vmax.f32 %v441, 0.0
        %v466 = vmax.f32 %v444, 0.0
        %v467 = vmax.f32 %v449, 0.0
        %v468 = vmax.f32 %v452, 0.0
        %v469 = vmax.f32 %v457, 0.0
        %v470 = vmax.f32 %v460, 0.0
        %vm471 = vcmask 261248
        %v472 = vsel %vm471, %v433, 0.0
        %v473 = vsel %vm471, %v436, 0.0
        %v474 = vadd.f32 %v472, %v473
        %v475 = vsel %vm471, %v441, 0.0
        %v476 = vadd.f32 %v474, %v475
        %v477 = vsel %vm471, %v444, 0.0
        %v478 = vadd.f32 %v476, %v477
        %v479 = vsel %vm471, %v449, 0.0
        %v480 = vadd.f32 %v478, %v479
        %v481 = vsel %vm471, %v452, 0.0
        %v482 = vadd.f32 %v480, %v481
        %v483 = vsel %vm471, %v457, 0.0
        %v484 = vadd.f32 %v482, %v483
        %v485 = vsel %vm471, %v460, 0.0
        %v486 = vadd.f32 %v484, %v485
        %v487 = vrot.slane %v486, 4
        %v488 = vadd.f32 %v486, %v487
        %v489 = vrot.slane %v488, 2
        %v490 = vadd.f32 %v488, %v489
        %v491 = vrot.slane %v490, 1
        %v492 = vadd.f32 %v490, %v491
        %v493 = vrcp.pop 64.0
        %v494 = vmul.f32 %v492, %v493
        %v495 = vmax.f32 %v494, 0.0
        %vm496 = vcmask 130048
        %v497 = vsel %vm496, %v463, %v495
        %v498 = vsel %vm496, %v464, %v495
        %v499 = vsel %vm496, %v465, %v495
        %v500 = vsel %vm496, %v466, %v495
        %v501 = vsel %vm496, %v467, %v495
        %v502 = vsel %vm496, %v468, %v495
        %v503 = vsel %vm496, %v469, %v495
        %v504 = vsel %vm496, %v470, %v495
        %v505 = vpack.c.bf16 %v498, %v497
        %v506 = vpack.c.bf16 %v500, %v499
        %v507 = vpack.c.bf16 %v502, %v501
        %v508 = vpack.c.bf16 %v504, %v503
        %v510 = vlaneseq
        %v511 = vshrl.u32 %v510, 7
        %v512 = vsub.s32 0, %v511
        %v513 = vrot.slane %v300, %v512
        %v519 = vunpack.c.l.b16 %v288
        %v520 = vunpack.c.l.b16 %v289
        %v521 = vunpack.c.l.b16 %v290
        %v522 = vunpack.c.l.b16 %v291
        %v523 = vpack.c.b16 %v520, %v519
        %v524 = vpack.c.b16 %v522, %v521
        %vm527 = vcmask 261120
        %v529 = vsel %vm527, %v505, 0
        %v532 = vsel %vm527, %v506, 0
        %v535 = vsel %vm527, %v507, 0
        %v538 = vsel %vm527, %v508, 0
        %540 = vmatprep.subr.bf16.mxu0 0
        %541 = vmatpush1.bf16.msra.mxu0 0
        %542 = vmatprep.subr.bf16.mxu0 0
        %543 = vmatpush1.bf16.msra.mxu0 0
        %544 = vmatprep.subr.bf16.mxu0 0
        %545 = vmatpush1.bf16.msra.mxu0 0
        %546 = vmatprep.subr.bf16.mxu0 0
        %547 = vmatpush1.bf16.msra.mxu0 0
        %548 = vmatprep.subr.bf16.mxu0 0
        %549 = vmatpush1.bf16.msra.mxu0 0
        %550 = vmatprep.subr.bf16.mxu0 0
        %551 = vmatpush1.bf16.msra.mxu0 0
        %552 = vmatprep.subr.bf16.mxu0 0
        %553 = vmatpush1.bf16.msra.mxu0 %v524
        %554 = vmatprep.subr.bf16.mxu0 0
        %555 = vmatpush1.bf16.msra.mxu0 %v523
        %556 = vmatprep.subr.bf16.mxu0 0
        %557 = vmatpush2.bf16.msra.mxu0 0
        %558 = vmatprep.subr.bf16.mxu0 0
        %559 = vmatpush2.bf16.msra.mxu0 0
        %560 = vmatprep.subr.bf16.mxu0 0
        %561 = vmatpush2.bf16.msra.mxu0 0
        %562 = vmatprep.subr.bf16.mxu0 0
        %563 = vmatpush2.bf16.msra.mxu0 0
        %564 = vmatprep.subr.bf16.mxu0 0
        %565 = vmatpush2.bf16.msra.mxu0 0
        %566 = vmatprep.subr.bf16.mxu0 0
        %567 = vmatpush2.bf16.msra.mxu0 0
        %568 = vmatprep.subr.bf16.mxu0 0
        %569 = vmatpush2.bf16.msra.mxu0 0
        %570 = vmatprep.subr.bf16.mxu0 0
        %571 = vmatpush2.bf16.msra.mxu0 0
        %572 = vmatprep.mubr.bf16.mxu0 0
        %573 = vmatmul.mubr.bf16.gmra.mxu0 %v529
        %v574 = vpop.f32.mrf.mxu0
        %v575 = vadd.f32 %v513, %v574
        %v576 = vpop.f32.mrf.mxu0
        %v577 = vpop.f32.mrf.mxu0
        %v578 = vadd.f32 %v513, %v577
        %v579 = vpop.f32.mrf.mxu0
        %580 = vmatprep.mubr.bf16.mxu0 0
        %581 = vmatmul.mubr.bf16.gmra.mxu0 %v532
        %v582 = vpop.f32.mrf.mxu0
        %v583 = vadd.f32 %v513, %v582
        %v584 = vpop.f32.mrf.mxu0
        %v585 = vpop.f32.mrf.mxu0
        %v586 = vadd.f32 %v513, %v585
        %v587 = vpop.f32.mrf.mxu0
        %588 = vmatprep.mubr.bf16.mxu0 0
        %589 = vmatmul.mubr.bf16.gmra.mxu0 %v535
        %v590 = vpop.f32.mrf.mxu0
        %v591 = vadd.f32 %v513, %v590
        %v592 = vpop.f32.mrf.mxu0
        %v593 = vpop.f32.mrf.mxu0
        %v594 = vadd.f32 %v513, %v593
        %v595 = vpop.f32.mrf.mxu0
        %596 = vmatprep.mubr.bf16.mxu0 0
        %597 = vmatmul.mubr.bf16.gmra.mxu0 %v538
        %v598 = vpop.f32.mrf.mxu0
        %v599 = vadd.f32 %v513, %v598
        %v600 = vpop.f32.mrf.mxu0
        %v601 = vpop.f32.mrf.mxu0
        %v602 = vadd.f32 %v513, %v601
        %v603 = vpop.f32.mrf.mxu0
        %604 = vdwg.mxu0
        %v605 = vxor.u32 %v575, 2147483648
        %v606 = vxor.u32 %v578, 2147483648
        %v607 = vxor.u32 %v583, 2147483648
        %v608 = vxor.u32 %v586, 2147483648
        %v609 = vxor.u32 %v591, 2147483648
        %v610 = vxor.u32 %v594, 2147483648
        %v611 = vxor.u32 %v599, 2147483648
        %v612 = vxor.u32 %v602, 2147483648
        %v613 = vmul.f32 %v605, 1.442695
        %v614 = vpow.pop %v613
        %v615 = vmul.f32 %v606, 1.442695
        %v616 = vpow.pop %v615
        %v617 = vmul.f32 %v607, 1.442695
        %v618 = vpow.pop %v617
        %v619 = vmul.f32 %v608, 1.442695
        %v620 = vpow.pop %v619
        %v621 = vmul.f32 %v609, 1.442695
        %v622 = vpow.pop %v621
        %v623 = vmul.f32 %v610, 1.442695
        %v624 = vpow.pop %v623
        %v625 = vmul.f32 %v611, 1.442695
        %v626 = vpow.pop %v625
        %v627 = vmul.f32 %v612, 1.442695
        %v628 = vpow.pop %v627
        %v629 = vadd.f32 %v614, 1.0
        %v630 = vadd.f32 %v616, 1.0
        %v631 = vadd.f32 %v618, 1.0
        %v632 = vadd.f32 %v620, 1.0
        %v633 = vadd.f32 %v622, 1.0
        %v634 = vadd.f32 %v624, 1.0
        %v635 = vadd.f32 %v626, 1.0
        %v636 = vadd.f32 %v628, 1.0
        %v637 = vrcp.pop %v629
        %v638 = vmul.f32 1.0, %v637
        %v639 = vrcp.pop %v630
        %v640 = vmul.f32 1.0, %v639
        %v641 = vrcp.pop %v631
        %v642 = vmul.f32 1.0, %v641
        %v643 = vrcp.pop %v632
        %v644 = vmul.f32 1.0, %v643
        %v645 = vrcp.pop %v633
        %v646 = vmul.f32 1.0, %v645
        %v647 = vrcp.pop %v634
        %v648 = vmul.f32 1.0, %v647
        %v649 = vrcp.pop %v635
        %v650 = vmul.f32 1.0, %v649
        %v651 = vrcp.pop %v636
        %v652 = vmul.f32 1.0, %v651
        %v653 = vmul.f32 %v638, %v335
        %v654 = vmul.f32 %v640, %v336
        %v655 = vmul.f32 %v642, %v337
        %v656 = vmul.f32 %v644, %v338
        %v657 = vmul.f32 %v646, %v339
        %v658 = vmul.f32 %v648, %v340
        %v659 = vmul.f32 %v650, %v341
        %v660 = vmul.f32 %v652, %v342
        %v661 = vadd.f32 %v327, %v653
        %v662 = vadd.f32 %v328, %v654
        %v663 = vadd.f32 %v329, %v655
        %v664 = vadd.f32 %v330, %v656
        %v665 = vadd.f32 %v331, %v657
        %v666 = vadd.f32 %v332, %v658
        %v667 = vadd.f32 %v333, %v659
        %v668 = vadd.f32 %v334, %v660
        %v669 = vpack.c.bf16 %v662, %v661
        %v670 = vpack.c.bf16 %v664, %v663
        %v671 = vpack.c.bf16 %v666, %v665
        %v672 = vpack.c.bf16 %v668, %v667
        %v674 = vlaneseq
        %v675 = vshrl.u32 %v674, 7
        %v676 = vsub.s32 0, %v675
        %v677 = vrot.slane %v299, %v676
        %v687 = vunpack.c.l.b16 %v280
        %v688 = vunpack.c.l.b16 %v281
        %v689 = vunpack.c.l.b16 %v282
        %v690 = vunpack.c.l.b16 %v283
        %v691 = vunpack.c.l.b16 %v284
        %v692 = vunpack.c.l.b16 %v285
        %v693 = vunpack.c.l.b16 %v286
        %v694 = vunpack.c.l.b16 %v287
        %v695 = vpack.c.b16 %v688, %v687
        %v696 = vpack.c.b16 %v690, %v689
        %v697 = vpack.c.b16 %v692, %v691
        %v698 = vpack.c.b16 %v694, %v693
        %v704 = vsel %vm385, %v669, 0
        %v707 = vsel %vm385, %v670, 0
        %v710 = vsel %vm385, %v671, 0
        %v713 = vsel %vm385, %v672, 0
        %715 = vmatprep.subr.bf16.mxu0 0
        %716 = vmatpush1.bf16.msra.mxu0 0
        %717 = vmatprep.subr.bf16.mxu0 0
        %718 = vmatpush1.bf16.msra.mxu0 0
        %719 = vmatprep.subr.bf16.mxu0 0
        %720 = vmatpush1.bf16.msra.mxu0 0
        %721 = vmatprep.subr.bf16.mxu0 0
        %722 = vmatpush1.bf16.msra.mxu0 0
        %723 = vmatprep.subr.bf16.mxu0 0
        %724 = vmatpush1.bf16.msra.mxu0 %v698
        %725 = vmatprep.subr.bf16.mxu0 0
        %726 = vmatpush1.bf16.msra.mxu0 %v697
        %727 = vmatprep.subr.bf16.mxu0 0
        %728 = vmatpush1.bf16.msra.mxu0 %v696
        %729 = vmatprep.subr.bf16.mxu0 0
        %730 = vmatpush1.bf16.msra.mxu0 %v695
        %731 = vmatprep.subr.bf16.mxu0 0
        %732 = vmatpush2.bf16.msra.mxu0 0
        %733 = vmatprep.subr.bf16.mxu0 0
        %734 = vmatpush2.bf16.msra.mxu0 0
        %735 = vmatprep.subr.bf16.mxu0 0
        %736 = vmatpush2.bf16.msra.mxu0 0
        %737 = vmatprep.subr.bf16.mxu0 0
        %738 = vmatpush2.bf16.msra.mxu0 0
        %739 = vmatprep.subr.bf16.mxu0 0
        %740 = vmatpush2.bf16.msra.mxu0 0
        %741 = vmatprep.subr.bf16.mxu0 0
        %742 = vmatpush2.bf16.msra.mxu0 0
        %743 = vmatprep.subr.bf16.mxu0 0
        %744 = vmatpush2.bf16.msra.mxu0 0
        %745 = vmatprep.subr.bf16.mxu0 0
        %746 = vmatpush2.bf16.msra.mxu0 0
        %747 = vmatprep.mubr.bf16.mxu0 0
        %748 = vmatmul.mubr.bf16.gmra.mxu0 %v704
        %v749 = vpop.f32.mrf.mxu0
        %v750 = vadd.f32 %v677, %v749
        %v751 = vpop.f32.mrf.mxu0
        %v752 = vpop.f32.mrf.mxu0
        %v753 = vadd.f32 %v677, %v752
        %v754 = vpop.f32.mrf.mxu0
        %755 = vmatprep.mubr.bf16.mxu0 0
        %756 = vmatmul.mubr.bf16.gmra.mxu0 %v707
        %v757 = vpop.f32.mrf.mxu0
        %v758 = vadd.f32 %v677, %v757
        %v759 = vpop.f32.mrf.mxu0
        %v760 = vpop.f32.mrf.mxu0
        %v761 = vadd.f32 %v677, %v760
        %v762 = vpop.f32.mrf.mxu0
        %763 = vmatprep.mubr.bf16.mxu0 0
        %764 = vmatmul.mubr.bf16.gmra.mxu0 %v710
        %v765 = vpop.f32.mrf.mxu0
        %v766 = vadd.f32 %v677, %v765
        %v767 = vpop.f32.mrf.mxu0
        %v768 = vpop.f32.mrf.mxu0
        %v769 = vadd.f32 %v677, %v768
        %v770 = vpop.f32.mrf.mxu0
        %771 = vmatprep.mubr.bf16.mxu0 0
        %772 = vmatmul.mubr.bf16.gmra.mxu0 %v713
        %v773 = vpop.f32.mrf.mxu0
        %v774 = vadd.f32 %v677, %v773
        %v775 = vpop.f32.mrf.mxu0
        %v776 = vpop.f32.mrf.mxu0
        %v777 = vadd.f32 %v677, %v776
        %v778 = vpop.f32.mrf.mxu0
        %779 = vdwg.mxu0
        %v780 = vmax.f32 %v750, 0.0
        %v781 = vmax.f32 %v753, 0.0
        %v782 = vmax.f32 %v758, 0.0
        %v783 = vmax.f32 %v761, 0.0
        %v784 = vmax.f32 %v766, 0.0
        %v785 = vmax.f32 %v769, 0.0
        %v786 = vmax.f32 %v774, 0.0
        %v787 = vmax.f32 %v777, 0.0
        %v788 = vsel %vm471, %v750, 0.0
        %v789 = vsel %vm471, %v753, 0.0
        %v790 = vadd.f32 %v788, %v789
        %v791 = vsel %vm471, %v758, 0.0
        %v792 = vadd.f32 %v790, %v791
        %v793 = vsel %vm471, %v761, 0.0
        %v794 = vadd.f32 %v792, %v793
        %v795 = vsel %vm471, %v766, 0.0
        %v796 = vadd.f32 %v794, %v795
        %v797 = vsel %vm471, %v769, 0.0
        %v798 = vadd.f32 %v796, %v797
        %v799 = vsel %vm471, %v774, 0.0
        %v800 = vadd.f32 %v798, %v799
        %v801 = vsel %vm471, %v777, 0.0
        %v802 = vadd.f32 %v800, %v801
        %v803 = vrot.slane %v802, 4
        %v804 = vadd.f32 %v802, %v803
        %v805 = vrot.slane %v804, 2
        %v806 = vadd.f32 %v804, %v805
        %v807 = vrot.slane %v806, 1
        %v808 = vadd.f32 %v806, %v807
        %v809 = vmul.f32 %v808, %v493
        %v810 = vmax.f32 %v809, 0.0
        %v811 = vsel %vm496, %v780, %v810
        %v812 = vsel %vm496, %v781, %v810
        %v813 = vsel %vm496, %v782, %v810
        %v814 = vsel %vm496, %v783, %v810
        %v815 = vsel %vm496, %v784, %v810
        %v816 = vsel %vm496, %v785, %v810
        %v817 = vsel %vm496, %v786, %v810
        %v818 = vsel %vm496, %v787, %v810
        %v819 = vpack.c.bf16 %v812, %v811
        %v820 = vpack.c.bf16 %v814, %v813
        %v821 = vpack.c.bf16 %v816, %v815
        %v822 = vpack.c.bf16 %v818, %v817
        %v824 = vlaneseq
        %v825 = vshrl.u32 %v824, 7
        %v826 = vsub.s32 0, %v825
        %v827 = vrot.slane %v302, %v826
        %v833 = vunpack.c.l.b16 %v293
        %v834 = vunpack.c.l.b16 %v294
        %v835 = vunpack.c.l.b16 %v295
        %v836 = vunpack.c.l.b16 %v296
        %v837 = vpack.c.b16 %v834, %v833
        %v838 = vpack.c.b16 %v836, %v835
        %v842 = vsel %vm527, %v819, 0
        %v845 = vsel %vm527, %v820, 0
        %v848 = vsel %vm527, %v821, 0
        %v851 = vsel %vm527, %v822, 0
        %853 = vmatprep.subr.bf16.mxu0 0
        %854 = vmatpush1.bf16.msra.mxu0 0
        %855 = vmatprep.subr.bf16.mxu0 0
        %856 = vmatpush1.bf16.msra.mxu0 0
        %857 = vmatprep.subr.bf16.mxu0 0
        %858 = vmatpush1.bf16.msra.mxu0 0
        %859 = vmatprep.subr.bf16.mxu0 0
        %860 = vmatpush1.bf16.msra.mxu0 0
        %861 = vmatprep.subr.bf16.mxu0 0
        %862 = vmatpush1.bf16.msra.mxu0 0
        %863 = vmatprep.subr.bf16.mxu0 0
        %864 = vmatpush1.bf16.msra.mxu0 0
        %865 = vmatprep.subr.bf16.mxu0 0
        %866 = vmatpush1.bf16.msra.mxu0 %v838
        %867 = vmatprep.subr.bf16.mxu0 0
        %868 = vmatpush1.bf16.msra.mxu0 %v837
        %869 = vmatprep.subr.bf16.mxu0 0
        %870 = vmatpush2.bf16.msra.mxu0 0
        %871 = vmatprep.subr.bf16.mxu0 0
        %872 = vmatpush2.bf16.msra.mxu0 0
        %873 = vmatprep.subr.bf16.mxu0 0
        %874 = vmatpush2.bf16.msra.mxu0 0
        %875 = vmatprep.subr.bf16.mxu0 0
        %876 = vmatpush2.bf16.msra.mxu0 0
        %877 = vmatprep.subr.bf16.mxu0 0
        %878 = vmatpush2.bf16.msra.mxu0 0
        %879 = vmatprep.subr.bf16.mxu0 0
        %880 = vmatpush2.bf16.msra.mxu0 0
        %881 = vmatprep.subr.bf16.mxu0 0
        %882 = vmatpush2.bf16.msra.mxu0 0
        %883 = vmatprep.subr.bf16.mxu0 0
        %884 = vmatpush2.bf16.msra.mxu0 0
        %885 = vmatprep.mubr.bf16.mxu0 0
        %886 = vmatmul.mubr.bf16.gmra.mxu0 %v842
        %v887 = vpop.f32.mrf.mxu0
        %v888 = vadd.f32 %v827, %v887
        %v889 = vpop.f32.mrf.mxu0
        %v890 = vpop.f32.mrf.mxu0
        %v891 = vadd.f32 %v827, %v890
        %v892 = vpop.f32.mrf.mxu0
        %893 = vmatprep.mubr.bf16.mxu0 0
        %894 = vmatmul.mubr.bf16.gmra.mxu0 %v845
        %v895 = vpop.f32.mrf.mxu0
        %v896 = vadd.f32 %v827, %v895
        %v897 = vpop.f32.mrf.mxu0
        %v898 = vpop.f32.mrf.mxu0
        %v899 = vadd.f32 %v827, %v898
        %v900 = vpop.f32.mrf.mxu0
        %901 = vmatprep.mubr.bf16.mxu0 0
        %902 = vmatmul.mubr.bf16.gmra.mxu0 %v848
        %v903 = vpop.f32.mrf.mxu0
        %v904 = vadd.f32 %v827, %v903
        %v905 = vpop.f32.mrf.mxu0
        %v906 = vpop.f32.mrf.mxu0
        %v907 = vadd.f32 %v827, %v906
        %v908 = vpop.f32.mrf.mxu0
        %909 = vmatprep.mubr.bf16.mxu0 0
        %910 = vmatmul.mubr.bf16.gmra.mxu0 %v851
        %v911 = vpop.f32.mrf.mxu0
        %v912 = vadd.f32 %v827, %v911
        %v913 = vpop.f32.mrf.mxu0
        %v914 = vpop.f32.mrf.mxu0
        %v915 = vadd.f32 %v827, %v914
        %v916 = vpop.f32.mrf.mxu0
        %917 = vdwg.mxu0
        %v918 = vxor.u32 %v888, 2147483648
        %v919 = vxor.u32 %v891, 2147483648
        %v920 = vxor.u32 %v896, 2147483648
        %v921 = vxor.u32 %v899, 2147483648
        %v922 = vxor.u32 %v904, 2147483648
        %v923 = vxor.u32 %v907, 2147483648
        %v924 = vxor.u32 %v912, 2147483648
        %v925 = vxor.u32 %v915, 2147483648
        %v926 = vmul.f32 %v918, 1.442695
        %v927 = vpow.pop %v926
        %v928 = vmul.f32 %v919, 1.442695
        %v929 = vpow.pop %v928
        %v930 = vmul.f32 %v920, 1.442695
        %v931 = vpow.pop %v930
        %v932 = vmul.f32 %v921, 1.442695
        %v933 = vpow.pop %v932
        %v934 = vmul.f32 %v922, 1.442695
        %v935 = vpow.pop %v934
        %v936 = vmul.f32 %v923, 1.442695
        %v937 = vpow.pop %v936
        %v938 = vmul.f32 %v924, 1.442695
        %v939 = vpow.pop %v938
        %v940 = vmul.f32 %v925, 1.442695
        %v941 = vpow.pop %v940
        %v942 = vadd.f32 %v927, 1.0
        %v943 = vadd.f32 %v929, 1.0
        %v944 = vadd.f32 %v931, 1.0
        %v945 = vadd.f32 %v933, 1.0
        %v946 = vadd.f32 %v935, 1.0
        %v947 = vadd.f32 %v937, 1.0
        %v948 = vadd.f32 %v939, 1.0
        %v949 = vadd.f32 %v941, 1.0
        %v950 = vrcp.pop %v942
        %v951 = vmul.f32 1.0, %v950
        %v952 = vrcp.pop %v943
        %v953 = vmul.f32 1.0, %v952
        %v954 = vrcp.pop %v944
        %v955 = vmul.f32 1.0, %v954
        %v956 = vrcp.pop %v945
        %v957 = vmul.f32 1.0, %v956
        %v958 = vrcp.pop %v946
        %v959 = vmul.f32 1.0, %v958
        %v960 = vrcp.pop %v947
        %v961 = vmul.f32 1.0, %v960
        %v962 = vrcp.pop %v948
        %v963 = vmul.f32 1.0, %v962
        %v964 = vrcp.pop %v949
        %v965 = vmul.f32 1.0, %v964
        %v966 = vmul.f32 %v951, %v335
        %v967 = vmul.f32 %v953, %v336
        %v968 = vmul.f32 %v955, %v337
        %v969 = vmul.f32 %v957, %v338
        %v970 = vmul.f32 %v959, %v339
        %v971 = vmul.f32 %v961, %v340
        %v972 = vmul.f32 %v963, %v341
        %v973 = vmul.f32 %v965, %v342
        %v974 = vadd.f32 %v327, %v966
        %v975 = vadd.f32 %v328, %v967
        %v976 = vadd.f32 %v329, %v968
        %v977 = vadd.f32 %v330, %v969
        %v978 = vadd.f32 %v331, %v970
        %v979 = vadd.f32 %v332, %v971
        %v980 = vadd.f32 %v333, %v972
        %v981 = vadd.f32 %v334, %v973
        %v982 = vpack.c.bf16 %v975, %v974
        %v983 = vpack.c.bf16 %v977, %v976
        %v984 = vpack.c.bf16 %v979, %v978
        %v985 = vpack.c.bf16 %v981, %v980
        %v990 = vunpack.c.l.b16 %v982
        %v991 = vunpack.c.h.b16 %v982
        %v992 = vunpack.c.l.b16 %v983
        %v993 = vunpack.c.h.b16 %v983
        %v994 = vunpack.c.l.b16 %v984
        %v995 = vunpack.c.h.b16 %v984
        %v996 = vunpack.c.l.b16 %v985
        %v997 = vunpack.c.h.b16 %v985
        %v998 = vpack.c.b16 %v990, %v990
        %v999 = vpack.c.b16 %v991, %v991
        %v1000 = vpack.c.b16 %v992, %v992
        %v1001 = vpack.c.b16 %v993, %v993
        %v1002 = vpack.c.b16 %v994, %v994
        %v1003 = vpack.c.b16 %v995, %v995
        %v1004 = vpack.c.b16 %v996, %v996
        %v1005 = vpack.c.b16 %v997, %v997
        %vm1014 = vcmask 519168
        %1015 = vst.msk [vmem:[%s259] sm:$0xf] %vm1014, %v998
        %1016 = vst.msk [vmem:[%s259 + $0x4] sm:$0xf] %vm1014, %v999
        %1017 = vst.msk [vmem:[%s259 + $0x8] sm:$0xf] %vm1014, %v1000
        %1018 = vst.msk [vmem:[%s259 + $0xc] sm:$0xf] %vm1014, %v1001
        %1019 = vst.msk [vmem:[%s259 + $0x10] sm:$0xf] %vm1014, %v1002
        %1020 = vst.msk [vmem:[%s259 + $0x14] sm:$0xf] %vm1014, %v1003
        %1021 = vst.msk [vmem:[%s259 + $0x18] sm:$0xf] %vm1014, %v1004
        %1022 = vst.msk [vmem:[%s259 + $0x1c] sm:$0xf] %vm1014, %v1005
        %s1023 = sand.u32 %s164, 1
        %s1024 = scalar_lea.sflag [#allocation3], %s1023
        %s1025 = sand.u32 %s164, 1
        %s1026 = smul.addr %s1025, 32
        %s1027 = scalar_lea.vmem [#allocation2], %s1026
        // Predicated region
        $region45: #{iaff_forward_nhwc.1} parent=43 // pred_check
          %p1028 = pneg %p174
        $region46: #{iaff_forward_nhwc.1} parent=43 // pred_check_branch
          %1030 = sbr.rel (%p1028) target = $region48
        $region47: #{iaff_forward_nhwc.1} parent=43 // pred_region
          %s1032 = ssub.s32 512, 512
          %1033 = vsyncadd %s1024, %s1032
          %s1034 = smul.addr %s20, 8
          %s1035 = smul.addr %s1034, 64
          %s1036 = scalar_lea.hbm %s6, %s1035
          %s1037 = sshll.u32 %s1027, 4
          %s1038 = int_to_ptr.vmem [resolvable:$true] %s1037
          %1043 = dma.vmem_to_hbm [thread:$0]  %s1038, 512, %s1036, %s1024, 64, 64, 4
        $region48: #{iaff_forward_nhwc.1} parent=43 // pred_fallthru
          _
      $region44: #{iaff_forward_nhwc.1} parent=5 // pred_fallthru
        _
      %p1044 = scmp.le.s32.totalorder 2, %s15
      // Predicated region
      $region49: #{iaff_forward_nhwc.1} parent=5 // pred_check
        %p1045 = pneg %p1044
      $region50: #{iaff_forward_nhwc.1} parent=5 // pred_check_branch
        %1047 = sbr.rel (%p1045) target = $region52
      $region51: #{iaff_forward_nhwc.1} parent=5 // pred_region
        %s1048 = ssub.s32 %s15, 2
        // Predicated region
        $region53: #{iaff_forward_nhwc.1} parent=51 // pred_check
          %p1049 = pneg %p180
        $region54: #{iaff_forward_nhwc.1} parent=51 // pred_check_branch
          %1051 = sbr.rel (%p1049) target = $region56
        $region55: #{iaff_forward_nhwc.1} parent=51 // pred_region
          %s1052 = sand.u32 %s165, 1
          %s1053 = scalar_lea.sflag [#allocation3], %s1052
          %s1054 = sand.u32 %s165, 1
          %s1055 = smul.addr %s1054, 32
          %s1056 = scalar_lea.vmem [#allocation2], %s1055
          %1057 = dma.done %s1053, 512
        $region56: #{iaff_forward_nhwc.1} parent=51 // pred_fallthru
          _
      $region52: #{iaff_forward_nhwc.1} parent=5 // pred_fallthru
        _
    $region6: #{iaff_forward_nhwc.1} parent=1 // loop_footer
      %s19 = sadd.s32 1, %s15
    $region7: #{iaff_forward_nhwc.1} parent=1 // loop_footer_branch
      %14 = sbr.rel target = $region3
    $region8: #{iaff_forward_nhwc.1} parent=1 // loop_exit
      _
    %1058 = vsyncpa [#allocation3], 1
    %s1059 = scalar_lea.sflag [#allocation3], 1
    %1060 = vsyncpa %s1059, 1

</llo_original>
